<compile_context>
chip_gen: v7x
topology: tpu7x:2x2x1
jax: 0.10.0
libtpu: 0.0.40
codegen_flags: <defaults>
</compile_context>

<pallas_src>
import functools

import jax
import jax.numpy as jnp
from jax.experimental import pallas as pl
from jax.experimental.pallas import tpu as pltpu

_UINT32_RANGE = float(1 << 32)


def _select_and_scale(x, ubits, p):
    # Integer-threshold dropout: drop iff bits < p * 2^32.  Full 32-bit mask
    # precision, and no shift / int->f32 convert / 1/2^24 multiply on the VPU.
    threshold = min(int(round(p * _UINT32_RANGE)), (1 << 32) - 1)
    keep = ubits >= jnp.uint32(threshold)
    # Stay in the input dtype (bf16 stays packed on v6e/v7x; f32 stays f32).
    scale = jnp.asarray(1.0 / (1.0 - p), dtype=x.dtype)
    return jnp.where(keep, x * scale, jnp.zeros_like(x))


def _dropout_kernel_tpu(seed_ref, x_ref, o_ref, *, p):
    # Per-tile reseed -> independent random streams per grid step, which makes
    # the grid safe to mark "parallel" (megacore sharding on v7x).
    pltpu.prng_seed(seed_ref[0] + pl.program_id(0))
    bits = pltpu.prng_random_bits(x_ref.shape)
    ubits = pltpu.bitcast(bits, jnp.uint32)
    o_ref[...] = _select_and_scale(x_ref[...], ubits, p)


def _dropout_kernel_bits(x_ref, bits_ref, o_ref, *, p):
    # Portable fallback: random bits generated outside the kernel.  Used when
    # the default backend is not TPU (e.g. CPU / interpret runs), where the
    # stateful TPU PRNG primitives have no lowering rule.
    o_ref[...] = _select_and_scale(x_ref[...], bits_ref[...], p)


def fairseq_dropout(x, p, *, seed=0, training=True, apply_during_inference=False):
    """Forward of FairseqDropout.

    Matches F.dropout(x, p, training=True) (zero with prob p, scale survivors
    by 1/(1-p)) when (training or apply_during_inference) and p > 0; otherwise
    identity, exactly like the PyTorch module.
    """
    if not (p > 0 and (training or apply_during_inference)):
        return x

    orig_shape = x.shape
    b, c, h, w = orig_shape
    x2d = x.reshape(b * c, h * w)
    rows, cols = x2d.shape
    itemsize = jnp.dtype(x2d.dtype).itemsize

    # Row-tiled blocks with the full last dim: every DMA is contiguous, the
    # last block dim equals the array dim (so any `cols` is legal), and
    # ~2 MiB per block keeps in+out double-buffering well inside the scoped
    # VMEM defaults on v5e (16 MiB) / v6e (32 MiB) / v7x (32 of 64 MiB).
    target_block_bytes = 2 * 1024 * 1024
    tile_rows = max(8, (target_block_bytes // max(cols * itemsize, 1)) // 8 * 8)
    tile_rows = min(tile_rows, rows)
    grid = (pl.cdiv(rows, tile_rows),)

    block = pl.BlockSpec((tile_rows, cols), lambda i: (i, 0))
    out_shape = jax.ShapeDtypeStruct((rows, cols), x.dtype)

    if jax.default_backend() == "tpu":
        seed_arr = jnp.asarray([seed], dtype=jnp.int32)
        out2d = pl.pallas_call(
            functools.partial(_dropout_kernel_tpu, p=float(p)),
            out_shape=out_shape,
            grid=grid,
            in_specs=[pl.BlockSpec(memory_space=pltpu.MemorySpace.SMEM), block],
            out_specs=block,
            compiler_params=pltpu.CompilerParams(
                # Grid steps are independent (per-tile reseed): shard across
                # both TensorCores on v7x; harmless on 1-TC v5e/v6e.
                dimension_semantics=("parallel",),
            ),
        )(seed_arr, x2d)
    else:
        # TODO(synk): pltpu.prng_seed/prng_random_bits have no non-TPU lowering;
        # feed host-generated uint32 bits instead (one extra HBM stream).
        bits = jax.random.bits(jax.random.PRNGKey(seed), (rows, cols), dtype=jnp.uint32)
        out2d = pl.pallas_call(
            functools.partial(_dropout_kernel_bits, p=float(p)),
            out_shape=out_shape,
            grid=grid,
            in_specs=[block, block],
            out_specs=block,
        )(x2d, bits)

    return out2d.reshape(orig_shape)


if __name__ == "__main__":
    key = jax.random.PRNGKey(0)
    # Small NCHW input consistent with a generic fairseq activation tensor.
    x = jax.random.normal(key, (2, 4, 16, 16), dtype=jnp.float32)
    p = 0.25

    # Training mode: dropout applied inside the Pallas kernel.
    y_train = jax.block_until_ready(fairseq_dropout(x, p, seed=0, training=True))

    # Eval mode (and apply_during_inference=False): identity, same as PyTorch.
    y_eval = jax.block_until_ready(fairseq_dropout(x, p, training=False))

    # Sanity checks: eval path is exact identity; train path zeros or scales by 1/(1-p).
    assert y_train.shape == x.shape and y_train.dtype == x.dtype
    assert bool(jnp.all(y_eval == x))
    scale = 1.0 / (1.0 - p)
    zero_mask = y_train == 0.0
    scaled_ok = jnp.isclose(y_train, x * scale, rtol=1e-5, atol=1e-6)
    assert bool(jnp.all(zero_mask | scaled_ok))
    drop_frac = float(jnp.mean(zero_mask.astype(jnp.float32)))
    assert 0.05 < drop_frac < 0.6  # loose statistical check around p=0.25

    print("KERNEL_OK")
</pallas_src>

<mosaic_0001>
module attributes {stable_mosaic.version = 11 : i64} {
  func.func @_dropout_kernel_bits(%arg0: i32, %arg1: memref<8x256xf32, #tpu.memory_space<vmem>>, %arg2: memref<8x256xi32, #tpu.memory_space<vmem>>, %arg3: memref<8x256xf32, #tpu.memory_space<vmem>>) attributes {dimension_semantics = [#tpu.dimension_semantics<arbitrary>], iteration_bounds = array<i64: 1>, scalar_prefetch = 0 : i64, scratch_operands = 0 : i64, tpu.core_type = #tpu.core_type<tc>, window_params = [{transform_indices = @transform_0, window_bounds = array<i64: 8, 256>}, {transform_indices = @transform_1, window_bounds = array<i64: 8, 256>}, {transform_indices = @transform_2, window_bounds = array<i64: 8, 256>}]} {
    %c0 = arith.constant 0 : index
    %c0_0 = arith.constant 0 : index
    %0 = vector.load %arg1[%c0, %c0_0] : memref<8x256xf32, #tpu.memory_space<vmem>>, vector<8x256xf32>
    %c0_1 = arith.constant 0 : index
    %c0_2 = arith.constant 0 : index
    %1 = vector.load %arg2[%c0_1, %c0_2] : memref<8x256xi32, #tpu.memory_space<vmem>>, vector<8x256xi32>
    %c1073741824_i32 = arith.constant 1073741824 : i32
    %2 = vector.broadcast %c1073741824_i32 : i32 to vector<8x256xi32>
    %3 = arith.cmpi uge, %1, %2 : vector<8x256xi32>
    %cst = arith.constant 1.33333337 : f32
    %4 = vector.broadcast %cst : f32 to vector<8x256xf32>
    %5 = arith.mulf %0, %4 : vector<8x256xf32>
    %cst_3 = arith.constant 0.000000e+00 : f32
    %6 = vector.broadcast %cst_3 : f32 to vector<8x256xf32>
    %7 = arith.select %3, %5, %6 : vector<8x256xi1>, vector<8x256xf32>
    %c0_4 = arith.constant 0 : index
    %c0_5 = arith.constant 0 : index
    %8 = vector.load %arg3[%c0_4, %c0_5] : memref<8x256xf32, #tpu.memory_space<vmem>>, vector<8x256xf32>
    tpu.vector_store %arg3[%c0_4, %c0_5], %7 {strides = array<i32>} : memref<8x256xf32, #tpu.memory_space<vmem>>, vector<8x256xf32>,
    return
  }
  func.func @transform_0(%arg0: i32) -> (i32, i32) {
    %c0_i32 = arith.constant 0 : i32
    %c0_i32_0 = arith.constant 0 : i32
    return %arg0, %c0_i32 : i32, i32
  }
  func.func @transform_1(%arg0: i32) -> (i32, i32) {
    %c0_i32 = arith.constant 0 : i32
    %c0_i32_0 = arith.constant 0 : i32
    return %arg0, %c0_i32 : i32, i32
  }
  func.func @transform_2(%arg0: i32) -> (i32, i32) {
    %c0_i32 = arith.constant 0 : i32
    %c0_i32_0 = arith.constant 0 : i32
    return %arg0, %c0_i32 : i32, i32
  }
}

</mosaic_0001>

<llo_original>
// kernel: tpu_custom_call.1
$region0: #{tpu_custom_call.1}
  #allocation0 [shape = 'u32[]', space=smem, size = 0x4, offset = 0x4, fixed_abs, tag = 'smem constant byte address 0x4 - core index']
  #allocation1 [shape = 'u32[144,128]{1,0:T(1,128)}', space=vmem, size = 0x12000, scoped, tag = 'internal scratch']
  %s0 = inlined_call_operand.hbm [shape: f32[8,256], index: 0, kind: input, shape index: {}]
  %s1 = inlined_call_operand.hbm [shape: u32[8,256], index: 1, kind: input, shape index: {}]
  %s2 = inlined_call_operand.hbm [shape: f32[8,256], index: 2, kind: output, shape index: {}]
  %s3 = sld [smem:[#allocation0]]
  $region26: #{tpu_custom_call.1} parent=0
    _
  %s5 = ssub.s32 1, %s3
  %s6 = scalar_select 0, %s5, %s3
  $region1: #{tpu_custom_call.1} parent=0
    #allocation2 [shape = 'u8[8192]{0}', space=vmem, size = 0x2000, scoped, tag = 'input window, operand 0, single buffered']
    #allocation3 [shape = 's32[1]{0}', space=sflag, size = 0x4, scoped, tag = 'scoped memory for tpu_custom_call.1']
    #allocation4 [shape = 's32[1]{0}', space=sflag, size = 0x4, scoped, tag = 'scoped memory for tpu_custom_call.1']
    #allocation5 [shape = 'u8[8192]{0}', space=vmem, size = 0x2000, scoped, tag = 'input window, operand 1, single buffered']
    #allocation6 [shape = 's32[1]{0}', space=sflag, size = 0x4, scoped, tag = 'scoped memory for tpu_custom_call.1']
    #allocation7 [shape = 'u8[8192]{0}', space=vmem, size = 0x2000, scoped, tag = 'output window, operand 0, single buffered']
    %7 = vsyncpa [#allocation3], 0
    %8 = vsyncpa [#allocation6], 0
    %9 = vsyncpa [#allocation4], 0
    // Predicated region
    $region2: #{tpu_custom_call.1} parent=1 // pred_check
      _
    $region3: #{tpu_custom_call.1} parent=1 // pred_check_branch
      %11 = sbr.rel (0) target = $region5
    $region4: #{tpu_custom_call.1} parent=1 // pred_region
      %s13 = ssub.s32 256, 256
      %14 = vsyncadd [#allocation3], %s13
      %s16 = sshll.u32 [#allocation2], 4
      %s17 = int_to_ptr.vmem [resolvable:$true] %s16
      %19 = dma.hbm_to_vmem [thread:$0]  %s0, 256, %s17, [#allocation3]
    $region5: #{tpu_custom_call.1} parent=1 // pred_fallthru
      _
    // Predicated region
    $region6: #{tpu_custom_call.1} parent=1 // pred_check
      _
    $region7: #{tpu_custom_call.1} parent=1 // pred_check_branch
      %21 = sbr.rel (0) target = $region9
    $region8: #{tpu_custom_call.1} parent=1 // pred_region
      %s23 = ssub.s32 256, 256
      %24 = vsyncadd [#allocation6], %s23
      %s26 = sshll.u32 [#allocation5], 4
      %s27 = int_to_ptr.vmem [resolvable:$true] %s26
      %29 = dma.hbm_to_vmem [thread:$0]  %s1, 256, %s27, [#allocation6]
    $region9: #{tpu_custom_call.1} parent=1 // pred_fallthru
      _
    // Predicated region
    $region10: #{tpu_custom_call.1} parent=1 // pred_check
      _
    $region11: #{tpu_custom_call.1} parent=1 // pred_check_branch
      %31 = sbr.rel (0) target = $region13
    $region12: #{tpu_custom_call.1} parent=1 // pred_region
      %32 = dma.done [#allocation3], 256
    $region13: #{tpu_custom_call.1} parent=1 // pred_fallthru
      _
    // Predicated region
    $region14: #{tpu_custom_call.1} parent=1 // pred_check
      _
    $region15: #{tpu_custom_call.1} parent=1 // pred_check_branch
      %34 = sbr.rel (0) target = $region17
    $region16: #{tpu_custom_call.1} parent=1 // pred_region
      %35 = dma.done [#allocation6], 256
    $region17: #{tpu_custom_call.1} parent=1 // pred_fallthru
      _
    %v36 = vld [vmem:[#allocation2] sm:$0xff]
    %v37 = vld [vmem:[#allocation2 + $0x8] sm:$0xff]
    %v38 = vld [vmem:[#allocation5] sm:$0xff]
    %v39 = vld [vmem:[#allocation5 + $0x8] sm:$0xff]
    %vm40 = vcmp.ge.u32.totalorder %v38, 1073741824
    %vm41 = vcmp.ge.u32.totalorder %v39, 1073741824
    %v42 = vmul.f32 %v36, 1.3333334
    %v43 = vmul.f32 %v37, 1.3333334
    %v44 = vsel %vm40, %v42, 0.0
    %v45 = vsel %vm41, %v43, 0.0
    %46 = vst [vmem:[#allocation7] sm:$0xff] %v44
    %47 = vst [vmem:[#allocation7 + $0x8] sm:$0xff] %v45
    // Predicated region
    $region18: #{tpu_custom_call.1} parent=1 // pred_check
      _
    $region19: #{tpu_custom_call.1} parent=1 // pred_check_branch
      %49 = sbr.rel (0) target = $region21
    $region20: #{tpu_custom_call.1} parent=1 // pred_region
      %s51 = ssub.s32 256, 256
      %52 = vsyncadd [#allocation4], %s51
      %s54 = sshll.u32 [#allocation7], 4
      %s55 = int_to_ptr.vmem [resolvable:$true] %s54
      %57 = dma.vmem_to_hbm [thread:$0]  %s55, 256, %s2, [#allocation4]
    $region21: #{tpu_custom_call.1} parent=1 // pred_fallthru
      _
    // Predicated region
    $region22: #{tpu_custom_call.1} parent=1 // pred_check
      _
    $region23: #{tpu_custom_call.1} parent=1 // pred_check_branch
      %59 = sbr.rel (0) target = $region25
    $region24: #{tpu_custom_call.1} parent=1 // pred_region
      %60 = dma.done [#allocation4], 256
    $region25: #{tpu_custom_call.1} parent=1 // pred_fallthru
      _
    %61 = vsyncpa [#allocation3], 1
    %62 = vsyncpa [#allocation6], 1
    %63 = vsyncpa [#allocation4], 1

</llo_original>
